<compile_context>
chip_gen: v7x
topology: tpu7x:2x2x1
jax: 0.10.0
libtpu: 0.0.40
codegen_flags: <defaults>
</compile_context>

<pallas_src>
import jax
import jax.numpy as jnp
from jax.experimental import pallas as pl
from jax.experimental.pallas import tpu as pltpu

_LANE = 128
_SUBLANE = 8


def _round_up(x, m):
    return (x + m - 1) // m * m


def _finetune_kernel(x_ref, m_ref, wp_ref, bp_ref, wc_ref, bc_ref, out_ref,
                     acc_ref, den_ref):
    """Streaming masked-mean pool + pooler + classifier + sigmoid.

    x_ref:   [tB, tS, Hp] bf16 token embeddings (current sequence tile)
    m_ref:   [tB, tS, 1]  f32  attention-mask tile
    wp_ref:  [Hp, Hp] bf16, bp_ref: [1, Hp] f32   (pooler dense, resident)
    wc_ref:  [Hp, Cp] bf16, bc_ref: [1, Cp] f32   (classifier dense, resident)
    out_ref: [tB, Cp] f32  sigmoid(logits), written on the last sequence step
    acc_ref: [tB, Hp] f32  running masked sum        (VMEM scratch)
    den_ref: [tB, 1]  f32  running mask count        (VMEM scratch)
    """
    s = pl.program_id(1)

    @pl.when(s == 0)
    def _init():
        acc_ref[...] = jnp.zeros_like(acc_ref)
        den_ref[...] = jnp.zeros_like(den_ref)

    # Masked partial sum for this sequence tile (f32 accumulate on the VPU).
    x = x_ref[...].astype(jnp.float32)          # [tB, tS, Hp]
    m = m_ref[...]                              # [tB, tS, 1]
    acc_ref[...] += jnp.sum(x * m, axis=1)      # [tB, Hp]
    den_ref[...] += jnp.sum(m, axis=1)          # [tB, 1]

    @pl.when(s == pl.num_programs(1) - 1)
    def _finalize():
        # mean = acc / max(count, 1)  -- reciprocal goes to the EUP slot.
        inv = pl.reciprocal(jnp.maximum(den_ref[...], 1.0), approx=True)
        mean = (acc_ref[...] * inv).astype(jnp.bfloat16)        # [tB, Hp]

        # Pooler: tanh(mean @ Wp + bp)  (bf16 MXU inputs, f32 accumulate).
        pooled = jnp.tanh(
            jnp.dot(mean, wp_ref[...], preferred_element_type=jnp.float32)
            + bp_ref[...]
        ).astype(jnp.bfloat16)                                  # [tB, Hp]

        # Classifier logits + FineTuneModel.forward sigmoid.
        logits = (
            jnp.dot(pooled, wc_ref[...], preferred_element_type=jnp.float32)
            + bc_ref[...]
        )                                                       # [tB, Cp]
        out_ref[...] = jax.nn.sigmoid(logits)                   # lane-dense


def finetune_forward(input_ids, attention_mask, params, *, tile_b=None,
                     tile_s=None):
    """Synthetic PhoBERT fine-tune forward pass (sigmoid(main_model(...).logits)).

    input_ids:      [B, S] int32 token ids
    attention_mask: [B, S] int / float mask (1 = keep, 0 = pad)
    params: dict with 'emb' [V, H], 'wp' [H, H], 'bp' [H], 'wc' [H, C], 'bc' [C]
    returns: [B, C] float32 sigmoid probabilities
    """
    emb = params["emb"]
    wp, bp = params["wp"], params["bp"]
    wc, bc = params["wc"], params["bc"]

    B, S = input_ids.shape
    V, H = emb.shape
    C = wc.shape[1]

    # Lane-dense padded dims (real PhoBERT H=768 is already a 128 multiple).
    Hp = _round_up(H, _LANE)
    Cp = _round_up(C, _LANE)

    if tile_b is None:
        tile_b = B if B <= _SUBLANE else _SUBLANE
    Bp = _round_up(B, tile_b)

    if tile_s is None:
        # Biggest bf16 x-tile whose double buffer stays ~<= 8 MiB, so the same
        # choice also fits v7x's smaller (64 MiB phys / 32 MiB scoped) VMEM.
        budget_elems = (8 * 1024 * 1024) // (2 * 2 * tile_b * Hp)
        tile_s = max(16, min(_round_up(S, 16), (budget_elems // 16) * 16))
    assert tile_s % 16 == 0, "bf16 sequence tile must be a multiple of 16"
    Sp = _round_up(S, tile_s)

    # Zero-pad parameters to lane-dense shapes; matmul weights in bf16.
    emb_p = jnp.zeros((V, Hp), jnp.bfloat16).at[:, :H].set(
        emb.astype(jnp.bfloat16))
    wp_p = jnp.zeros((Hp, Hp), jnp.bfloat16).at[:H, :H].set(
        wp.astype(jnp.bfloat16))
    bp_p = jnp.zeros((1, Hp), jnp.float32).at[0, :H].set(bp)
    wc_p = jnp.zeros((Hp, Cp), jnp.bfloat16).at[:H, :C].set(
        wc.astype(jnp.bfloat16))
    bc_p = jnp.zeros((1, Cp), jnp.float32).at[0, :C].set(bc)

    ids_p = jnp.zeros((Bp, Sp), jnp.int32).at[:B, :S].set(input_ids)
    mask_p = jnp.zeros((Bp, Sp, 1), jnp.float32).at[:B, :S, 0].set(
        attention_mask.astype(jnp.float32))

    # Glue: bf16 embedding gather (half the HBM traffic of the old f32 path).
    x = emb_p[ids_p]                                  # [Bp, Sp, Hp] bf16

    grid = (Bp // tile_b, Sp // tile_s)
    out = pl.pallas_call(
        _finetune_kernel,
        out_shape=jax.ShapeDtypeStruct((Bp, Cp), jnp.float32),
        grid=grid,
        in_specs=[
            # Streamed activation / mask tiles.
            pl.BlockSpec((tile_b, tile_s, Hp), lambda b, s: (b, s, 0)),
            pl.BlockSpec((tile_b, tile_s, 1), lambda b, s: (b, s, 0)),
            # Weights/biases: constant index_map -> fetched once, resident.
            pl.BlockSpec((Hp, Hp), lambda b, s: (0, 0)),
            pl.BlockSpec((1, Hp), lambda b, s: (0, 0)),
            pl.BlockSpec((Hp, Cp), lambda b, s: (0, 0)),
            pl.BlockSpec((1, Cp), lambda b, s: (0, 0)),
        ],
        # Output block is constant over the sequence axis (written at s==last).
        out_specs=pl.BlockSpec((tile_b, Cp), lambda b, s: (b, 0)),
        scratch_shapes=[
            pltpu.VMEM((tile_b, Hp), jnp.float32),    # masked-sum accumulator
            pltpu.VMEM((tile_b, 1), jnp.float32),     # mask count
        ],
        compiler_params=pltpu.CompilerParams(
            # Batch axis shards across v7x's 2 TensorCores; sequence axis is
            # the reduction (accumulator) axis.
            dimension_semantics=("parallel", "arbitrary"),
        ),
    )(x, mask_p, wp_p, bp_p, wc_p, bc_p)

    return out[:B, :C]


def make_params(key, vocab=64, hidden=32, num_labels=4):
    k_emb, k_wp, k_bp, k_wc, k_bc = jax.random.split(key, 5)
    scale = 0.02
    return {
        "emb": scale * jax.random.normal(k_emb, (vocab, hidden), jnp.float32),
        "wp": scale * jax.random.normal(k_wp, (hidden, hidden), jnp.float32),
        "bp": scale * jax.random.normal(k_bp, (hidden,), jnp.float32),
        "wc": scale * jax.random.normal(k_wc, (hidden, num_labels), jnp.float32),
        "bc": scale * jax.random.normal(k_bc, (num_labels,), jnp.float32),
    }


if __name__ == "__main__":
    key = jax.random.PRNGKey(0)
    k_params, k_ids = jax.random.split(key)

    B, S, V, H, C = 2, 32, 64, 32, 4
    params = make_params(k_params, vocab=V, hidden=H, num_labels=C)

    input_ids = jax.random.randint(k_ids, (B, S), 0, V, dtype=jnp.int32)
    # Simple padding pattern: second example has 6 padded positions.
    attention_mask = jnp.stack(
        [jnp.ones((S,), jnp.int32),
         jnp.concatenate([jnp.ones((S - 6,), jnp.int32),
                          jnp.zeros((6,), jnp.int32)])],
        axis=0,
    )

    # tile_s=16 forces multiple sequence-grid steps even at this small S,
    # exercising the streaming init/accumulate/finalize path.
    out = finetune_forward(input_ids, attention_mask, params, tile_s=16)
    out = jax.block_until_ready(out)

    # Sanity checks: shape and sigmoid range.
    assert out.shape == (B, C)
    assert bool(jnp.all((out > 0.0) & (out < 1.0)))

    # Pure-JAX reference replicating the kernel's bf16 storage / MXU inputs
    # (f32 accumulation everywhere, exact division instead of approx recip).
    f32 = jnp.float32
    emb_bf = params["emb"].astype(jnp.bfloat16).astype(f32)
    wp_bf = params["wp"].astype(jnp.bfloat16).astype(f32)
    wc_bf = params["wc"].astype(jnp.bfloat16).astype(f32)
    x_ref = emb_bf[input_ids]
    m = attention_mask.astype(f32)
    mean = jnp.sum(x_ref * m[:, :, None], axis=1) / jnp.maximum(
        jnp.sum(m, axis=1, keepdims=True), 1.0)
    mean = mean.astype(jnp.bfloat16).astype(f32)
    pooled = jnp.tanh(mean @ wp_bf + params["bp"])
    pooled = pooled.astype(jnp.bfloat16).astype(f32)
    logits = pooled @ wc_bf + params["bc"]
    ref = jax.nn.sigmoid(logits)

    assert bool(jnp.allclose(out, ref, atol=2e-3, rtol=0.0)), (
        float(jnp.max(jnp.abs(out - ref))))

    print("KERNEL_OK")
</pallas_src>

<mosaic_0001>
module attributes {stable_mosaic.version = 11 : i64} {
  func.func @_finetune_kernel(%arg0: i32, %arg1: i32, %arg2: memref<2x16x128xbf16, #tpu.memory_space<vmem>>, %arg3: memref<2x16x1xf32, #tpu.memory_space<vmem>>, %arg4: memref<128x128xbf16, #tpu.memory_space<vmem>>, %arg5: memref<1x128xf32, #tpu.memory_space<vmem>>, %arg6: memref<128x128xbf16, #tpu.memory_space<vmem>>, %arg7: memref<1x128xf32, #tpu.memory_space<vmem>>, %arg8: memref<2x128xf32, #tpu.memory_space<vmem>>, %arg9: memref<2x128xf32, #tpu.memory_space<vmem>>, %arg10: memref<2x1xf32, #tpu.memory_space<vmem>>) attributes {dimension_semantics = [#tpu.dimension_semantics<parallel>, #tpu.dimension_semantics<arbitrary>], iteration_bounds = array<i64: 1, 2>, scalar_prefetch = 0 : i64, scratch_operands = 2 : i64, tpu.core_type = #tpu.core_type<tc>, window_params = [{transform_indices = @transform_0, window_bounds = array<i64: 2, 16, 128>}, {transform_indices = @transform_1, window_bounds = array<i64: 2, 16, 1>}, {pipeline_mode = #tpu.pipeline_mode<synchronous>, transform_indices = @transform_2, window_bounds = array<i64: 128, 128>}, {pipeline_mode = #tpu.pipeline_mode<synchronous>, transform_indices = @transform_3, window_bounds = array<i64: 1, 128>}, {pipeline_mode = #tpu.pipeline_mode<synchronous>, transform_indices = @transform_4, window_bounds = array<i64: 128, 128>}, {pipeline_mode = #tpu.pipeline_mode<synchronous>, transform_indices = @transform_5, window_bounds = array<i64: 1, 128>}, {transform_indices = @transform_6, window_bounds = array<i64: 2, 128>}]} {
    %c0_i32 = arith.constant 0 : i32
    %0 = arith.cmpi eq, %arg1, %c0_i32 : i32
    %1 = arith.extui %0 : i1 to i32
    %c0_i32_0 = arith.constant 0 : i32
    %2 = arith.cmpi ne, %1, %c0_i32_0 : i32
    scf.if %2 {
      %cst_16 = arith.constant 0.000000e+00 : f32
      %19 = vector.broadcast %cst_16 : f32 to vector<2x128xf32>
      %c0_17 = arith.constant 0 : index
      %c0_18 = arith.constant 0 : index
      %20 = vector.load %arg9[%c0_17, %c0_18] : memref<2x128xf32, #tpu.memory_space<vmem>>, vector<2x128xf32>
      tpu.vector_store %arg9[%c0_17, %c0_18], %19 {strides = array<i32>} : memref<2x128xf32, #tpu.memory_space<vmem>>, vector<2x128xf32>,
      %cst_19 = arith.constant 0.000000e+00 : f32
      %21 = vector.broadcast %cst_19 : f32 to vector<2x1xf32>
      %c0_20 = arith.constant 0 : index
      %c0_21 = arith.constant 0 : index
      %22 = vector.load %arg10[%c0_20, %c0_21] : memref<2x1xf32, #tpu.memory_space<vmem>>, vector<2x1xf32>
      tpu.vector_store %arg10[%c0_20, %c0_21], %21 {strides = array<i32>} : memref<2x1xf32, #tpu.memory_space<vmem>>, vector<2x1xf32>,
    } else {
    }
    %c0 = arith.constant 0 : index
    %c0_1 = arith.constant 0 : index
    %c0_2 = arith.constant 0 : index
    %3 = vector.load %arg2[%c0, %c0_1, %c0_2] : memref<2x16x128xbf16, #tpu.memory_space<vmem>>, vector<2x16x128xbf16>
    %4 = arith.extf %3 : vector<2x16x128xbf16> to vector<2x16x128xf32>
    %c0_3 = arith.constant 0 : index
    %c0_4 = arith.constant 0 : index
    %c0_5 = arith.constant 0 : index
    %5 = vector.load %arg3[%c0_3, %c0_4, %c0_5] : memref<2x16x1xf32, #tpu.memory_space<vmem>>, vector<2x16x1xf32>
    %c0_6 = arith.constant 0 : index
    %c0_7 = arith.constant 0 : index
    %6 = vector.load %arg9[%c0_6, %c0_7] : memref<2x128xf32, #tpu.memory_space<vmem>>, vector<2x128xf32>
    %7 = vector.broadcast %5 : vector<2x16x1xf32> to vector<2x16x128xf32>
    %8 = arith.mulf %4, %7 : vector<2x16x128xf32>
    %cst = arith.constant dense<0.000000e+00> : vector<2x128xf32>
    %9 = vector.multi_reduction <add>, %8, %cst [1] : vector<2x16x128xf32> to vector<2x128xf32>
    %10 = arith.addf %6, %9 : vector<2x128xf32>
    %c0_8 = arith.constant 0 : index
    %c0_9 = arith.constant 0 : index
    %11 = vector.load %arg9[%c0_8, %c0_9] : memref<2x128xf32, #tpu.memory_space<vmem>>, vector<2x128xf32>
    tpu.vector_store %arg9[%c0_8, %c0_9], %10 {strides = array<i32>} : memref<2x128xf32, #tpu.memory_space<vmem>>, vector<2x128xf32>,
    %c0_10 = arith.constant 0 : index
    %c0_11 = arith.constant 0 : index
    %12 = vector.load %arg10[%c0_10, %c0_11] : memref<2x1xf32, #tpu.memory_space<vmem>>, vector<2x1xf32>
    %cst_12 = arith.constant dense<0.000000e+00> : vector<2x1xf32>
    %13 = vector.multi_reduction <add>, %5, %cst_12 [1] : vector<2x16x1xf32> to vector<2x1xf32>
    %14 = arith.addf %12, %13 : vector<2x1xf32>
    %c0_13 = arith.constant 0 : index
    %c0_14 = arith.constant 0 : index
    %15 = vector.load %arg10[%c0_13, %c0_14] : memref<2x1xf32, #tpu.memory_space<vmem>>, vector<2x1xf32>
    tpu.vector_store %arg10[%c0_13, %c0_14], %14 {strides = array<i32>} : memref<2x1xf32, #tpu.memory_space<vmem>>, vector<2x1xf32>,
    %c1_i32 = arith.constant 1 : i32
    %16 = arith.cmpi eq, %arg1, %c1_i32 : i32
    %17 = arith.extui %16 : i1 to i32
    %c0_i32_15 = arith.constant 0 : i32
    %18 = arith.cmpi ne, %17, %c0_i32_15 : i32
    scf.if %18 {
      %c0_16 = arith.constant 0 : index
      %c0_17 = arith.constant 0 : index
      %19 = vector.load %arg10[%c0_16, %c0_17] : memref<2x1xf32, #tpu.memory_space<vmem>>, vector<2x1xf32>
      %cst_18 = arith.constant 1.000000e+00 : f32
      %20 = vector.broadcast %cst_18 : f32 to vector<2x1xf32>
      %21 = arith.maximumf %19, %20 : vector<2x1xf32>
      %22 = tpu.reciprocal %21 {approx = true} : vector<2x1xf32> -> vector<2x1xf32>
      %c0_19 = arith.constant 0 : index
      %c0_20 = arith.constant 0 : index
      %23 = vector.load %arg9[%c0_19, %c0_20] : memref<2x128xf32, #tpu.memory_space<vmem>>, vector<2x128xf32>
      %24 = vector.broadcast %22 : vector<2x1xf32> to vector<2x128xf32>
      %25 = arith.mulf %23, %24 : vector<2x128xf32>
      %26 = arith.truncf %25 : vector<2x128xf32> to vector<2x128xbf16>
      %c0_21 = arith.constant 0 : index
      %c0_22 = arith.constant 0 : index
      %27 = vector.load %arg4[%c0_21, %c0_22] : memref<128x128xbf16, #tpu.memory_space<vmem>>, vector<128x128xbf16>
      %cst_23 = arith.constant dense<0.000000e+00> : vector<2x128xf32>
      %28 = tpu.matmul %26, %27, %cst_23 {dimension_numbers = #tpu.dot_dimension_numbers<[1], [0], [0], [1], [0, 0, 1, 1], [], []>} : vector<2x128xbf16>, vector<128x128xbf16>, vector<2x128xf32> -> vector<2x128xf32>
      %c0_24 = arith.constant 0 : index
      %c0_25 = arith.constant 0 : index
      %29 = vector.load %arg5[%c0_24, %c0_25] : memref<1x128xf32, #tpu.memory_space<vmem>>, vector<1x128xf32>
      %30 = vector.broadcast %29 : vector<1x128xf32> to vector<2x128xf32>
      %31 = arith.addf %28, %30 : vector<2x128xf32>
      %32 = math.tanh %31 : vector<2x128xf32>
      %33 = arith.truncf %32 : vector<2x128xf32> to vector<2x128xbf16>
      %c0_26 = arith.constant 0 : index
      %c0_27 = arith.constant 0 : index
      %34 = vector.load %arg6[%c0_26, %c0_27] : memref<128x128xbf16, #tpu.memory_space<vmem>>, vector<128x128xbf16>
      %cst_28 = arith.constant dense<0.000000e+00> : vector<2x128xf32>
      %35 = tpu.matmul %33, %34, %cst_28 {dimension_numbers = #tpu.dot_dimension_numbers<[1], [0], [0], [1], [0, 0, 1, 1], [], []>} : vector<2x128xbf16>, vector<128x128xbf16>, vector<2x128xf32> -> vector<2x128xf32>
      %c0_29 = arith.constant 0 : index
      %c0_30 = arith.constant 0 : index
      %36 = vector.load %arg7[%c0_29, %c0_30] : memref<1x128xf32, #tpu.memory_space<vmem>>, vector<1x128xf32>
      %37 = vector.broadcast %36 : vector<1x128xf32> to vector<2x128xf32>
      %38 = arith.addf %35, %37 : vector<2x128xf32>
      %39 = arith.negf %38 : vector<2x128xf32>
      %40 = math.exp %39 : vector<2x128xf32>
      %cst_31 = arith.constant 1.000000e+00 : f32
      %41 = vector.broadcast %cst_31 : f32 to vector<2x128xf32>
      %42 = arith.addf %41, %40 : vector<2x128xf32>
      %43 = arith.divf %41, %42 : vector<2x128xf32>
      %c0_32 = arith.constant 0 : index
      %c0_33 = arith.constant 0 : index
      %44 = vector.load %arg8[%c0_32, %c0_33] : memref<2x128xf32, #tpu.memory_space<vmem>>, vector<2x128xf32>
      tpu.vector_store %arg8[%c0_32, %c0_33], %43 {strides = array<i32>} : memref<2x128xf32, #tpu.memory_space<vmem>>, vector<2x128xf32>,
    } else {
    }
    return
  }
  func.func @transform_0(%arg0: i32, %arg1: i32) -> (i32, i32, i32) {
    %c0_i32 = arith.constant 0 : i32
    %c0_i32_0 = arith.constant 0 : i32
    return %arg0, %arg1, %c0_i32 : i32, i32, i32
  }
  func.func @transform_1(%arg0: i32, %arg1: i32) -> (i32, i32, i32) {
    %c0_i32 = arith.constant 0 : i32
    %c0_i32_0 = arith.constant 0 : i32
    return %arg0, %arg1, %c0_i32 : i32, i32, i32
  }
  func.func @transform_2(%arg0: i32, %arg1: i32) -> (i32, i32) {
    %c0_i32 = arith.constant 0 : i32
    %c0_i32_0 = arith.constant 0 : i32
    %c0_i32_1 = arith.constant 0 : i32
    return %c0_i32, %c0_i32_0 : i32, i32
  }
  func.func @transform_3(%arg0: i32, %arg1: i32) -> (i32, i32) {
    %c0_i32 = arith.constant 0 : i32
    %c0_i32_0 = arith.constant 0 : i32
    %c0_i32_1 = arith.constant 0 : i32
    return %c0_i32, %c0_i32_0 : i32, i32
  }
  func.func @transform_4(%arg0: i32, %arg1: i32) -> (i32, i32) {
    %c0_i32 = arith.constant 0 : i32
    %c0_i32_0 = arith.constant 0 : i32
    %c0_i32_1 = arith.constant 0 : i32
    return %c0_i32, %c0_i32_0 : i32, i32
  }
  func.func @transform_5(%arg0: i32, %arg1: i32) -> (i32, i32) {
    %c0_i32 = arith.constant 0 : i32
    %c0_i32_0 = arith.constant 0 : i32
    %c0_i32_1 = arith.constant 0 : i32
    return %c0_i32, %c0_i32_0 : i32, i32
  }
  func.func @transform_6(%arg0: i32, %arg1: i32) -> (i32, i32) {
    %c0_i32 = arith.constant 0 : i32
    %c0_i32_0 = arith.constant 0 : i32
    return %arg0, %c0_i32 : i32, i32
  }
}

</mosaic_0001>

<llo_original>
// kernel: tpu_custom_call.1
$region0: #{tpu_custom_call.1}
  #allocation0 [shape = 'u32[]', space=smem, size = 0x4, offset = 0x4, fixed_abs, tag = 'smem constant byte address 0x4 - core index']
  #allocation1 [shape = 'u32[144,128]{1,0:T(1,128)}', space=vmem, size = 0x12000, scoped, tag = 'internal scratch']
  #allocation2 [shape = 'f32[2,128]{1,0:T(2,128)}', space=vmem, size = 0x400, scoped, tag = 'scratch operand']
  #allocation3 [shape = 'f32[2,1]{1,0:T(2,128)}', space=vmem, size = 0x400, scoped, tag = 'scratch operand']
  #allocation11 [shape = 's32[]', space=sflag, size = 0x4, offset = 0, fixed_abs, tag = 'sflag constant byte address 0x0 - dummy sync flag']
  %s0 = inlined_call_operand.hbm [shape: bf16[2,32,128], index: 0, kind: input, shape index: {}]
  %s1 = inlined_call_operand.vmem [shape: f32[2,32,1], index: 1, kind: input, shape index: {}]
  %s2 = inlined_call_operand.vmem [shape: bf16[128,128], index: 2, kind: input, shape index: {}]
  %s3 = inlined_call_operand.vmem [shape: f32[1,128], index: 3, kind: input, shape index: {}]
  %s4 = inlined_call_operand.hbm [shape: bf16[128,128], index: 4, kind: input, shape index: {}]
  %s5 = inlined_call_operand.vmem [shape: f32[1,128], index: 5, kind: input, shape index: {}]
  %s6 = inlined_call_operand.hbm [shape: f32[2,128], index: 6, kind: output, shape index: {}]
  %s7 = sld [smem:[#allocation0]]
  $region111: #{tpu_custom_call.1} parent=0
    _
  %s9 = ssub.s32 1, %s7
  %s10 = scalar_select 0, %s9, %s7
  $region1: #{tpu_custom_call.1} parent=0
    #allocation4 [shape = 'u8[16384]{0}', space=vmem, size = 0x4000, scoped, tag = 'input window, operand 0']
    #allocation5 [shape = 's32[2]{0}', space=sflag, size = 0x8, scoped, tag = 'scoped memory for tpu_custom_call.1']
    #allocation6 [shape = 's32[2]{0}', space=sflag, size = 0x8, scoped, tag = 'scoped memory for tpu_custom_call.1']
    #allocation7 [shape = 'u8[32768]{0}', space=vmem, size = 0x8000, scoped, tag = 'input window, operand 1']
    #allocation8 [shape = 'u8[32768]{0}', space=vmem, size = 0x8000, scoped, tag = 'input window, operand 4, single buffered']
    #allocation9 [shape = 's32[1]{0}', space=sflag, size = 0x4, scoped, tag = 'scoped memory for tpu_custom_call.1']
    #allocation10 [shape = 'u8[1024]{0}', space=vmem, size = 0x400, scoped, tag = 'output window, operand 0, single buffered']
    %11 = vsyncpa [#allocation5], 0
    %s12 = scalar_lea.sflag [#allocation5], 1
    %13 = vsyncpa %s12, 0
    %14 = vsyncpa [#allocation9], 0
    %15 = vsyncpa [#allocation6], 0
    loop: start=0, step=1, limit=4
    $region2: #{tpu_custom_call.1} parent=1 // loop_pre_header
      _
    $region3: #{tpu_custom_call.1} parent=1 // loop_header
      %s17 = sphi 0, %s21
      %p18 = scmp.ge.s32.totalorder %s17, 4
      %s24 = sphi 0, %s36
      %s25 = sphi 0, %s32
      %s26 = sphi 0, %s24
      %s27 = sphi 0, %s25
      %s28 = sphi 0, %s26
      %s29 = sphi 0, %s27
      %s41 = sphi 0, %s43
      %s44 = sphi 0, %s41
      %s45 = sphi 0, %s44
      %s61 = sphi 0, %s45
      %s69 = sphi 0, %s71
      %s72 = sphi 0, %s69
      %s73 = sphi 0, %s72
      %s89 = sphi 0, %s73
      %s93 = sphi 0, %s93
      %s95 = sphi 0, %s93
      %s96 = sphi 0, %s95
      %s110 = sphi 0, %s96
      %s114 = sphi 0, %s114
      %s116 = sphi 0, %s114
      %s117 = sphi 0, %s116
      %s131 = sphi 0, %s117
      %s135 = sphi 0, %s135
      %s137 = sphi 0, %s135
      %s138 = sphi 0, %s137
      %s152 = sphi 0, %s138
      %s156 = sphi 0, %s156
      %s158 = sphi 0, %s156
      %s159 = sphi 0, %s158
      %s173 = sphi 0, %s159
      %s179 = sphi 0, %s181
      %s182 = sphi 0, %s179
      %s183 = sphi 0, %s182
      %s199 = sphi 0, %s183
    $region4: #{tpu_custom_call.1} parent=1 // loop_header_branch
      %20 = sbr.rel (%p18) target = $region8
    $region5: #{tpu_custom_call.1} parent=1 // loop_body
      %s22 = ssub.s32 %s17, 1
      %s23 = ssub.s32 %s17, 2
      %s30 = sadd.s32 1, %s25
      %p31 = scmp.ge.s32.totalorder %s30, 2
      %s32 = scalar_select %p31, 0, %s30
      %s33 = sadd.s32 1, %s24
      %s34 = scalar_select %p31, %s33, %s24
      %p35 = scmp.ge.s32.totalorder %s34, 1
      %s36 = scalar_select %p35, 0, %s34
      %s37 = ssub.s32 %s24, %s36
      %s38 = ssub.s32 %s25, %s32
      %s39 = sor.u32 %s37, %s38
      %p40 = scmp.eq.s32.totalorder %s39, 0
      %s42 = sadd.s32 %s41, 1
      %s43 = scalar_select %p40, %s41, %s42
      %p46 = pneg %p40
      %p47 = scmp.eq.s32.totalorder %s17, 1
      %p48 = por %p46, %p47
      %p49 = scmp.ne.s32.totalorder %s41, %s44
      %p50 = scmp.eq.s32.totalorder %s17, 0
      %p51 = por %p49, %p50
      %p52 = scmp.ne.s32.totalorder %s41, %s44
      %p53 = scmp.eq.s32.totalorder %s22, 1
      %p54 = por %p52, %p53
      %p55 = scmp.ne.s32.totalorder %s44, %s45
      %p56 = scmp.eq.s32.totalorder %s22, 0
      %p57 = por %p55, %p56
      %p58 = scmp.ne.s32.totalorder %s44, %s45
      %p59 = scmp.eq.s32.totalorder %s23, 1
      %p60 = por %p58, %p59
      %p62 = scmp.ne.s32.totalorder %s45, %s61
      %p63 = scmp.eq.s32.totalorder %s23, 0
      %p64 = por %p62, %p63
      %s65 = ssub.s32 %s24, %s36
      %s66 = ssub.s32 %s25, %s32
      %s67 = sor.u32 %s65, %s66
      %p68 = scmp.eq.s32.totalorder %s67, 0
      %s70 = sadd.s32 %s69, 1
      %s71 = scalar_select %p68, %s69, %s70
      %p74 = pneg %p68
      %p75 = scmp.eq.s32.totalorder %s17, 1
      %p76 = por %p74, %p75
      %p77 = scmp.ne.s32.totalorder %s69, %s72
      %p78 = scmp.eq.s32.totalorder %s17, 0
      %p79 = por %p77, %p78
      %p80 = scmp.ne.s32.totalorder %s69, %s72
      %p81 = scmp.eq.s32.totalorder %s22, 1
      %p82 = por %p80, %p81
      %p83 = scmp.ne.s32.totalorder %s72, %s73
      %p84 = scmp.eq.s32.totalorder %s22, 0
      %p85 = por %p83, %p84
      %p86 = scmp.ne.s32.totalorder %s72, %s73
      %p87 = scmp.eq.s32.totalorder %s23, 1
      %p88 = por %p86, %p87
      %p90 = scmp.ne.s32.totalorder %s73, %s89
      %p91 = scmp.eq.s32.totalorder %s23, 0
      %p92 = por %p90, %p91
      %s94 = sadd.s32 %s93, 1
      %p97 = scmp.eq.s32.totalorder %s17, 1
      %p98 = scmp.ne.s32.totalorder %s93, %s95
      %p99 = scmp.eq.s32.totalorder %s17, 0
      %p100 = por %p98, %p99
      %p101 = scmp.ne.s32.totalorder %s93, %s95
      %p102 = scmp.eq.s32.totalorder %s22, 1
      %p103 = por %p101, %p102
      %p104 = scmp.ne.s32.totalorder %s95, %s96
      %p105 = scmp.eq.s32.totalorder %s22, 0
      %p106 = por %p104, %p105
      %p107 = scmp.ne.s32.totalorder %s95, %s96
      %p108 = scmp.eq.s32.totalorder %s23, 1
      %p109 = por %p107, %p108
      %p111 = scmp.ne.s32.totalorder %s96, %s110
      %p112 = scmp.eq.s32.totalorder %s23, 0
      %p113 = por %p111, %p112
      %s115 = sadd.s32 %s114, 1
      %p118 = scmp.eq.s32.totalorder %s17, 1
      %p119 = scmp.ne.s32.totalorder %s114, %s116
      %p120 = scmp.eq.s32.totalorder %s17, 0
      %p121 = por %p119, %p120
      %p122 = scmp.ne.s32.totalorder %s114, %s116
      %p123 = scmp.eq.s32.totalorder %s22, 1
      %p124 = por %p122, %p123
      %p125 = scmp.ne.s32.totalorder %s116, %s117
      %p126 = scmp.eq.s32.totalorder %s22, 0
      %p127 = por %p125, %p126
      %p128 = scmp.ne.s32.totalorder %s116, %s117
      %p129 = scmp.eq.s32.totalorder %s23, 1
      %p130 = por %p128, %p129
      %p132 = scmp.ne.s32.totalorder %s117, %s131
      %p133 = scmp.eq.s32.totalorder %s23, 0
      %p134 = por %p132, %p133
      %s136 = sadd.s32 %s135, 1
      %p139 = scmp.eq.s32.totalorder %s17, 1
      %p140 = scmp.ne.s32.totalorder %s135, %s137
      %p141 = scmp.eq.s32.totalorder %s17, 0
      %p142 = por %p140, %p141
      %p143 = scmp.ne.s32.totalorder %s135, %s137
      %p144 = scmp.eq.s32.totalorder %s22, 1
      %p145 = por %p143, %p144
      %p146 = scmp.ne.s32.totalorder %s137, %s138
      %p147 = scmp.eq.s32.totalorder %s22, 0
      %p148 = por %p146, %p147
      %p149 = scmp.ne.s32.totalorder %s137, %s138
      %p150 = scmp.eq.s32.totalorder %s23, 1
      %p151 = por %p149, %p150
      %p153 = scmp.ne.s32.totalorder %s138, %s152
      %p154 = scmp.eq.s32.totalorder %s23, 0
      %p155 = por %p153, %p154
      %s157 = sadd.s32 %s156, 1
      %p160 = scmp.eq.s32.totalorder %s17, 1
      %p161 = scmp.ne.s32.totalorder %s156, %s158
      %p162 = scmp.eq.s32.totalorder %s17, 0
      %p163 = por %p161, %p162
      %p164 = scmp.ne.s32.totalorder %s156, %s158
      %p165 = scmp.eq.s32.totalorder %s22, 1
      %p166 = por %p164, %p165
      %p167 = scmp.ne.s32.totalorder %s158, %s159
      %p168 = scmp.eq.s32.totalorder %s22, 0
      %p169 = por %p167, %p168
      %p170 = scmp.ne.s32.totalorder %s158, %s159
      %p171 = scmp.eq.s32.totalorder %s23, 1
      %p172 = por %p170, %p171
      %p174 = scmp.ne.s32.totalorder %s159, %s173
      %p175 = scmp.eq.s32.totalorder %s23, 0
      %p176 = por %p174, %p175
      %s177 = ssub.s32 %s24, %s36
      %p178 = scmp.eq.s32.totalorder %s177, 0
      %s180 = sadd.s32 %s179, 1
      %s181 = scalar_select %p178, %s179, %s180
      %p184 = pneg %p178
      %p185 = scmp.eq.s32.totalorder %s17, 1
      %p186 = por %p184, %p185
      %p187 = scmp.ne.s32.totalorder %s179, %s182
      %p188 = scmp.eq.s32.totalorder %s17, 0
      %p189 = por %p187, %p188
      %p190 = scmp.ne.s32.totalorder %s179, %s182
      %p191 = scmp.eq.s32.totalorder %s22, 1
      %p192 = por %p190, %p191
      %p193 = scmp.ne.s32.totalorder %s182, %s183
      %p194 = scmp.eq.s32.totalorder %s22, 0
      %p195 = por %p193, %p194
      %p196 = scmp.ne.s32.totalorder %s182, %s183
      %p197 = scmp.eq.s32.totalorder %s23, 1
      %p198 = por %p196, %p197
      %p200 = scmp.ne.s32.totalorder %s183, %s199
      %p201 = scmp.eq.s32.totalorder %s23, 0
      %p202 = por %p200, %p201
      %p203 = scmp.le.s32.totalorder 1, %s17
      %p204 = scmp.lt.s32.totalorder %s17, 3
      %p205 = pnand %p203, %p204
      %p206 = pneg %p205
      // Predicated region
      $region9: #{tpu_custom_call.1} parent=5 // pred_check
        _
      $region10: #{tpu_custom_call.1} parent=5 // pred_check_branch
        %208 = sbr.rel (%p205) target = $region12
      $region11: #{tpu_custom_call.1} parent=5 // pred_region
        %s209 = ssub.s32 %s17, 1
        // Predicated region
        $region13: #{tpu_custom_call.1} parent=11 // pred_check
          %p210 = pneg %p106
        $region14: #{tpu_custom_call.1} parent=11 // pred_check_branch
          %212 = sbr.rel (%p210) target = $region16
        $region15: #{tpu_custom_call.1} parent=11 // pred_region
          _
        $region16: #{tpu_custom_call.1} parent=11 // pred_fallthru
          _
        // Predicated region
        $region17: #{tpu_custom_call.1} parent=11 // pred_check
          %p213 = pneg %p127
        $region18: #{tpu_custom_call.1} parent=11 // pred_check_branch
          %215 = sbr.rel (%p213) target = $region20
        $region19: #{tpu_custom_call.1} parent=11 // pred_region
          _
        $region20: #{tpu_custom_call.1} parent=11 // pred_fallthru
          _
        // Predicated region
        $region21: #{tpu_custom_call.1} parent=11 // pred_check
          %p216 = pneg %p148
        $region22: #{tpu_custom_call.1} parent=11 // pred_check_branch
          %218 = sbr.rel (%p216) target = $region24
        $region23: #{tpu_custom_call.1} parent=11 // pred_region
          %s220 = ssub.s32 1024, 1024
          %221 = vsyncadd [#allocation9], %s220
          %s222 = sshll.u32 [#allocation8], 4
          %s223 = int_to_ptr.vmem [resolvable:$true] %s222
          %228 = dma.hbm_to_vmem [thread:$0]  %s4, 1024, %s223, [#allocation9], 64, 64, 4
        $region24: #{tpu_custom_call.1} parent=11 // pred_fallthru
          _
        // Predicated region
        $region25: #{tpu_custom_call.1} parent=11 // pred_check
          %p229 = pneg %p169
        $region26: #{tpu_custom_call.1} parent=11 // pred_check_branch
          %231 = sbr.rel (%p229) target = $region28
        $region27: #{tpu_custom_call.1} parent=11 // pred_region
          _
        $region28: #{tpu_custom_call.1} parent=11 // pred_fallthru
          _
      $region12: #{tpu_custom_call.1} parent=5 // pred_fallthru
        _
      %p232 = scmp.lt.s32.totalorder %s17, 2
      // Predicated region
      $region29: #{tpu_custom_call.1} parent=5 // pred_check
        %p233 = pneg %p232
      $region30: #{tpu_custom_call.1} parent=5 // pred_check_branch
        %235 = sbr.rel (%p233) target = $region32
      $region31: #{tpu_custom_call.1} parent=5 // pred_region
        // Predicated region
        $region33: #{tpu_custom_call.1} parent=31 // pred_check
          %p236 = pneg %p51
        $region34: #{tpu_custom_call.1} parent=31 // pred_check_branch
          %238 = sbr.rel (%p236) target = $region36
        $region35: #{tpu_custom_call.1} parent=31 // pred_region
          #allocation12 [shape = 'u32[6]{0}', space=smem, size = 0x18, scoped, tag = 'DMA stride descriptor']
          %s239 = sand.u32 %s41, 1
          %s240 = scalar_lea.sflag [#allocation5], %s239
          %s241 = sand.u32 %s41, 1
          %s242 = smul.addr %s241, 16
          %s243 = scalar_lea.vmem [#allocation4], %s242
          %s244 = smul.u32 2, %s24
          %s245 = smul.u32 2, %s25
          %s247 = ssub.s32 256, 256
          %248 = vsyncadd %s240, %s247
          %s249 = smul.addr %s244, 4
          %s250 = sadd.s32 %s245, %s249
          %s251 = smul.addr %s250, 64
          %s252 = scalar_lea.hbm %s0, %s251
          %s254 = sshll.u32 1, 14
          %s255 = sxor.u32 4294967295, %s254
          %s257 = sld [smem:[#allocation0]]
          %s258 = sadd.s32 2, %s257
          %s260 = sshll.u32 7, 26
          %s261 = sxor.u32 4294967295, %s260
          %s262 = sand.u32 0, %s261
          %s263 = sshll.u32 %s258, 26
          %s264 = sor.u32 %s262, %s263
          %s265 = sshll.u32 %s243, 4
          %s266 = int_to_ptr.vmem [resolvable:$true] %s265
          %272 = sst [smem:[#allocation12]] 256
          %s273 = scalar_lea.smem [#allocation12], 1
          %274 = sst [smem:[%s273]] 128
          %s275 = scalar_lea.smem [#allocation12], 2
          %276 = sst [smem:[%s275]] 2
          %s277 = scalar_lea.smem [#allocation12], 3
          %278 = sst [smem:[%s277]] 64
          %s279 = scalar_lea.smem [#allocation12], 4
          %280 = sst [smem:[%s279]] 64
          %s281 = scalar_lea.smem [#allocation12], 5
          %282 = sst [smem:[%s281]] 4
          %284 = dma.general %s252, 256, %s266, %s240, [#allocation11], [#allocation12], %s264, 0
        $region36: #{tpu_custom_call.1} parent=31 // pred_fallthru
          _
        // Predicated region
        $region37: #{tpu_custom_call.1} parent=31 // pred_check
          %p285 = pneg %p79
        $region38: #{tpu_custom_call.1} parent=31 // pred_check_branch
          %287 = sbr.rel (%p285) target = $region40
        $region39: #{tpu_custom_call.1} parent=31 // pred_region
          %s288 = sand.u32 %s69, 1
          %s289 = sand.u32 %s69, 1
          %s290 = smul.addr %s289, 32
          %s291 = scalar_lea.vmem [#allocation7], %s290
          %s292 = smul.u32 2, %s24
          %s293 = smul.u32 2, %s25
          %s294 = smul.addr %s292, 4
          %s295 = sadd.s32 %s293, %s294
          %s296 = smul.addr %s295, 8
          %s297 = scalar_lea.vmem %s1, %s296
          // Predicated region
          $region41: #{tpu_custom_call.1} parent=39 // pred_check
            _
          $region42: #{tpu_custom_call.1} parent=39 // pred_check_branch
            %299 = sbr.rel (0) target = $region44
          $region43: #{tpu_custom_call.1} parent=39 // pred_region
            // Predicated region
            $region45: #{tpu_custom_call.1} parent=43 // pred_check
              _
            $region46: #{tpu_custom_call.1} parent=43 // pred_check_branch
              %301 = sbr.rel (0) target = $region48
            $region47: #{tpu_custom_call.1} parent=43 // pred_region
              // Predicated region
              $region60: #{tpu_custom_call.1} parent=47 // pred_check
                _
              $region61: #{tpu_custom_call.1} parent=47 // pred_check_branch
                %322 = sbr.rel (0) target = $region63
              $region62: #{tpu_custom_call.1} parent=47 // pred_region
                loop: start=0, step=1, limit=1
                $region64: #{tpu_custom_call.1} parent=62 // loop_pre_header
                  _
                $region65: #{tpu_custom_call.1} parent=62 // loop_header
                  %s324 = sphi 0, %s328
                  %p325 = scmp.ge.s32.totalorder %s324, 1
                  %s329 = sphi %s297, %s297
                  %s330 = sphi %s291, %s291
                $region66: #{tpu_custom_call.1} parent=62 // loop_header_branch
                  %327 = sbr.rel (%p325) target = $region70
                $region67: #{tpu_custom_call.1} parent=62 // loop_body
                  %v331 = vld [vmem:[%s329] sm:$0xff]
                  %332 = vst [vmem:[%s330] sm:$0xff] %v331
                  %v333 = vld [vmem:[%s329 + $0x8] sm:$0xff]
                  %334 = vst [vmem:[%s330 + $0x8] sm:$0xff] %v333
                  %v335 = vld [vmem:[%s329 + $0x20] sm:$0xff]
                  %336 = vst [vmem:[%s330 + $0x10] sm:$0xff] %v335
                  %v337 = vld [vmem:[%s329 + $0x28] sm:$0xff]
                  %338 = vst [vmem:[%s330 + $0x18] sm:$0xff] %v337
                $region68: #{tpu_custom_call.1} parent=62 // loop_footer
                  %s328 = sadd.s32 1, %s324
                $region69: #{tpu_custom_call.1} parent=62 // loop_footer_branch
                  %323 = sbr.rel target = $region65
                $region70: #{tpu_custom_call.1} parent=62 // loop_exit
                  _
              $region63: #{tpu_custom_call.1} parent=47 // pred_fallthru
                _
              // Predicated region
              $region71: #{tpu_custom_call.1} parent=47 // pred_check
                _
              $region72: #{tpu_custom_call.1} parent=47 // pred_check_branch
                %340 = sbr.rel target = $region74
              $region73: #{tpu_custom_call.1} parent=47 // pred_region
                _
              $region74: #{tpu_custom_call.1} parent=47 // pred_fallthru
                _
            $region48: #{tpu_custom_call.1} parent=43 // pred_fallthru
              _
            // Predicated region
            $region49: #{tpu_custom_call.1} parent=43 // pred_check
              _
            $region50: #{tpu_custom_call.1} parent=43 // pred_check_branch
              %303 = sbr.rel target = $region52
            $region51: #{tpu_custom_call.1} parent=43 // pred_region
              loop: start=0, step=1, limit=1
              $region53: #{tpu_custom_call.1} parent=51 // loop_pre_header
                _
              $region54: #{tpu_custom_call.1} parent=51 // loop_header
                %s306 = sphi 0, %s310
                %p307 = scmp.ge.s32.totalorder %s306, 1
                %s311 = sphi %s297, %s297
                %s312 = sphi %s291, %s291
              $region55: #{tpu_custom_call.1} parent=51 // loop_header_branch
                %309 = sbr.rel (%p307) target = $region59
              $region56: #{tpu_custom_call.1} parent=51 // loop_body
                %v313 = vld [vmem:[%s311] sm:$0xff]
                %314 = vst [vmem:[%s312] sm:$0xff] %v313
                %v315 = vld [vmem:[%s311 + $0x8] sm:$0xff]
                %316 = vst [vmem:[%s312 + $0x8] sm:$0xff] %v315
                %v317 = vld [vmem:[%s311 + $0x20] sm:$0xff]
                %318 = vst [vmem:[%s312 + $0x10] sm:$0xff] %v317
                %v319 = vld [vmem:[%s311 + $0x28] sm:$0xff]
                %320 = vst [vmem:[%s312 + $0x18] sm:$0xff] %v319
              $region57: #{tpu_custom_call.1} parent=51 // loop_footer
                %s310 = sadd.s32 1, %s306
              $region58: #{tpu_custom_call.1} parent=51 // loop_footer_branch
                %305 = sbr.rel target = $region54
              $region59: #{tpu_custom_call.1} parent=51 // loop_exit
                _
            $region52: #{tpu_custom_call.1} parent=43 // pred_fallthru
              _
          $region44: #{tpu_custom_call.1} parent=39 // pred_fallthru
            _
          %341 = vnop
        $region40: #{tpu_custom_call.1} parent=31 // pred_fallthru
          _
      $region32: #{tpu_custom_call.1} parent=5 // pred_fallthru
        _
      %p342 = scmp.le.s32.totalorder 1, %s17
      %p343 = scmp.lt.s32.totalorder %s17, 3
      %p344 = pnand %p342, %p343
      %p345 = pneg %p344
      // Predicated region
      $region75: #{tpu_custom_call.1} parent=5 // pred_check
        _
      $region76: #{tpu_custom_call.1} parent=5 // pred_check_branch
        %347 = sbr.rel (%p344) target = $region78
      $region77: #{tpu_custom_call.1} parent=5 // pred_region
        %s348 = ssub.s32 %s17, 1
        %s349 = sand.u32 %s44, 1
        %s350 = scalar_lea.sflag [#allocation5], %s349
        %s351 = sand.u32 %s44, 1
        %s352 = smul.addr %s351, 16
        %s353 = scalar_lea.vmem [#allocation4], %s352
        // Predicated region
        $region79: #{tpu_custom_call.1} parent=77 // pred_check
          %p354 = pneg %p57
        $region80: #{tpu_custom_call.1} parent=77 // pred_check_branch
          %356 = sbr.rel (%p354) target = $region82
        $region81: #{tpu_custom_call.1} parent=77 // pred_region
          %357 = dma.done %s350, 256
        $region82: #{tpu_custom_call.1} parent=77 // pred_fallthru
          _
        %s358 = sand.u32 %s72, 1
        %s359 = sand.u32 %s72, 1
        %s360 = smul.addr %s359, 32
        %s361 = scalar_lea.vmem [#allocation7], %s360
        // Predicated region
        $region83: #{tpu_custom_call.1} parent=77 // pred_check
          %p362 = pneg %p85
        $region84: #{tpu_custom_call.1} parent=77 // pred_check_branch
          %364 = sbr.rel (%p362) target = $region86
        $region85: #{tpu_custom_call.1} parent=77 // pred_region
          _
        $region86: #{tpu_custom_call.1} parent=77 // pred_fallthru
          _
        // Predicated region
        $region87: #{tpu_custom_call.1} parent=77 // pred_check
          %p365 = pneg %p148
        $region88: #{tpu_custom_call.1} parent=77 // pred_check_branch
          %367 = sbr.rel (%p365) target = $region90
        $region89: #{tpu_custom_call.1} parent=77 // pred_region
          %368 = dma.done [#allocation9], 1024
        $region90: #{tpu_custom_call.1} parent=77 // pred_fallthru
          _
        %s369 = sand.u32 %s44, 1
        %s370 = scalar_lea.sflag [#allocation5], %s369
        %s371 = sand.u32 %s44, 1
        %s372 = smul.addr %s371, 16
        %s373 = scalar_lea.vmem [#allocation4], %s372
        %p374 = pneg %p57
        %p375 = pneg %p54
        %s376 = sand.u32 %s72, 1
        %s377 = sand.u32 %s72, 1
        %s378 = smul.addr %s377, 32
        %s379 = scalar_lea.vmem [#allocation7], %s378
        %p380 = pneg %p85
        %p381 = pneg %p82
        %p382 = pneg %p106
        %p383 = pneg %p103
        %p384 = pneg %p127
        %p385 = pneg %p124
        %p386 = pneg %p148
        %p387 = pneg %p145
        %p388 = pneg %p169
        %p389 = pneg %p166
        %p390 = pneg %p195
        %p391 = pneg %p192
        %s392 = smul.u32 2, %s26
        %s393 = smul.u32 2, %s27
        %s394 = smul.u32 2, %s26
        %s395 = smul.u32 2, %s27
        %p397 = scmp.eq.s32.totalorder %s27, 0
        // Predicated region
        $region91: #{tpu_custom_call.1} parent=77 // pred_check
          %p398 = pneg %p397
        $region92: #{tpu_custom_call.1} parent=77 // pred_check_branch
          %400 = sbr.rel (%p398) target = $region94
        $region93: #{tpu_custom_call.1} parent=77 // pred_region
          %401 = vst [vmem:[#allocation2] sm:$0x3] 0.0
          %vm402 = vcmask 1024
          %403 = vst.msk [vmem:[#allocation3] sm:$0x3] %vm402, 0.0
        $region94: #{tpu_custom_call.1} parent=77 // pred_fallthru
          _
        %v404 = vld [vmem:[%s353] sm:$0xf]
        %v405 = vld [vmem:[%s353 + $0x4] sm:$0xf]
        %v406 = vld [vmem:[%s353 + $0x8] sm:$0xf]
        %v407 = vld [vmem:[%s353 + $0xc] sm:$0xf]
        %v408 = vunpack.c.l.bf16 %v404
        %v409 = vunpack.c.l.bf16 %v405
        %v410 = vunpack.c.l.bf16 %v406
        %v411 = vunpack.c.l.bf16 %v407
        %v412 = vld [vmem:[%s361] sm:$0xff]
        %v413 = vld [vmem:[%s361 + $0x8] sm:$0xff]
        %v414 = vld [vmem:[%s361 + $0x10] sm:$0xff]
        %v415 = vld [vmem:[%s361 + $0x18] sm:$0xff]
        %v416 = vld [vmem:[#allocation2] sm:$0x3]
        %418 = vset.pattern.permute.xlu0 0
        %419 = vperm.xlu0 %418, %v412
        %v420 = vpop.permute.xlu0 %419
        %423 = vset.pattern.permute.xlu0 0
        %424 = vperm.xlu0 %423, %v413
        %v425 = vpop.permute.xlu0 %424
        %428 = vset.pattern.permute.xlu0 0
        %429 = vperm.xlu0 %428, %v414
        %v430 = vpop.permute.xlu0 %429
        %433 = vset.pattern.permute.xlu0 0
        %434 = vperm.xlu0 %433, %v415
        %v435 = vpop.permute.xlu0 %434
        %v437 = vmul.f32 %v408, %v420
        %v438 = vmul.f32 %v409, %v425
        %v439 = vmul.f32 %v410, %v430
        %v440 = vmul.f32 %v411, %v435
        %v441 = vadd.f32 %v437, %v438
        %v442 = vrot.slane %v441, 4
        %v443 = vadd.f32 %v441, %v442
        %v444 = vrot.slane %v443, 2
        %v445 = vadd.f32 %v443, %v444
        %v446 = vrot.slane %v445, 1
        %v447 = vadd.f32 %v445, %v446
        %v448 = vadd.f32 %v439, %v440
        %v449 = vrot.slane %v448, 4
        %v450 = vadd.f32 %v448, %v449
        %v451 = vrot.slane %v450, 2
        %v452 = vadd.f32 %v450, %v451
        %v453 = vrot.slane %v452, 1
        %v454 = vadd.f32 %v452, %v453
        %vm457 = vcmask 1041409
        %v458 = vsel %vm457, %v454, %v447
        %v460 = vadd.f32 %v416, %v458
        %461 = vst [vmem:[#allocation2] sm:$0x3] %v460
        %v462 = vld [vmem:[#allocation3] sm:$0x3]
        %vm463 = vcmask 7168
        %v464 = vsel %vm463, %v412, 0.0
        %v465 = vsel %vm463, %v413, 0.0
        %v466 = vadd.f32 %v464, %v465
        %v467 = vrot.slane %v466, 4
        %v468 = vadd.f32 %v466, %v467
        %v469 = vrot.slane %v468, 2
        %v470 = vadd.f32 %v468, %v469
        %v471 = vrot.slane %v470, 1
        %v472 = vadd.f32 %v470, %v471
        %v473 = vsel %vm463, %v414, 0.0
        %v474 = vsel %vm463, %v415, 0.0
        %v475 = vadd.f32 %v473, %v474
        %v476 = vrot.slane %v475, 4
        %v477 = vadd.f32 %v475, %v476
        %v478 = vrot.slane %v477, 2
        %v479 = vadd.f32 %v477, %v478
        %v480 = vrot.slane %v479, 1
        %v481 = vadd.f32 %v479, %v480
        %v484 = vsel %vm457, %v481, %v472
        %v486 = vadd.f32 %v462, %v484
        %vm487 = vcmask 1024
        %488 = vst.msk [vmem:[#allocation3] sm:$0x3] %vm487, %v486
        %p489 = scmp.eq.s32.totalorder %s27, 1
        // Predicated region
        $region95: #{tpu_custom_call.1} parent=77 // pred_check
          %p490 = pneg %p489
        $region96: #{tpu_custom_call.1} parent=77 // pred_check_branch
          %492 = sbr.rel (%p490) target = $region98
        $region97: #{tpu_custom_call.1} parent=77 // pred_region
          %v493 = vld [vmem:[#allocation3] sm:$0x3]
          %v494 = vmax.f32 %v493, 1.0
          %v495 = vrcp.pop %v494
          %v496 = vld [vmem:[#allocation2] sm:$0x3]
          %498 = vset.pattern.permute.xlu0 0
          %499 = vperm.xlu0 %498, %v495
          %v500 = vpop.permute.xlu0 %499
          %v502 = vmul.f32 %v496, %v500
          %v503 = vpack.c.bf16 %v502, %v502
          %v504 = vld [vmem:[%s2] sm:$0xf]
          %v505 = vld [vmem:[%s2 + $0x4] sm:$0xf]
          %v506 = vld [vmem:[%s2 + $0x8] sm:$0xf]
          %v507 = vld [vmem:[%s2 + $0xc] sm:$0xf]
          %v508 = vld [vmem:[%s2 + $0x10] sm:$0xf]
          %v509 = vld [vmem:[%s2 + $0x14] sm:$0xf]
          %v510 = vld [vmem:[%s2 + $0x18] sm:$0xf]
          %v511 = vld [vmem:[%s2 + $0x1c] sm:$0xf]
          %v512 = vld [vmem:[%s2 + $0x20] sm:$0xf]
          %v513 = vld [vmem:[%s2 + $0x24] sm:$0xf]
          %v514 = vld [vmem:[%s2 + $0x28] sm:$0xf]
          %v515 = vld [vmem:[%s2 + $0x2c] sm:$0xf]
          %v516 = vld [vmem:[%s2 + $0x30] sm:$0xf]
          %v517 = vld [vmem:[%s2 + $0x34] sm:$0xf]
          %v518 = vld [vmem:[%s2 + $0x38] sm:$0xf]
          %v519 = vld [vmem:[%s2 + $0x3c] sm:$0xf]
          %v520 = vld [vmem:[%s3] sm:$0x1]
          %v522 = vlaneseq
          %v523 = vshrl.u32 %v522, 7
          %v524 = vsub.s32 0, %v523
          %v525 = vrot.slane %v520, %v524
          %v543 = vunpack.c.l.b16 %v504
          %v544 = vunpack.c.l.b16 %v505
          %v545 = vunpack.c.l.b16 %v506
          %v546 = vunpack.c.l.b16 %v507
          %v547 = vunpack.c.l.b16 %v508
          %v548 = vunpack.c.l.b16 %v509
          %v549 = vunpack.c.l.b16 %v510
          %v550 = vunpack.c.l.b16 %v511
          %v551 = vunpack.c.l.b16 %v512
          %v552 = vunpack.c.l.b16 %v513
          %v553 = vunpack.c.l.b16 %v514
          %v554 = vunpack.c.l.b16 %v515
          %v555 = vunpack.c.l.b16 %v516
          %v556 = vunpack.c.l.b16 %v517
          %v557 = vunpack.c.l.b16 %v518
          %v558 = vunpack.c.l.b16 %v519
          %v559 = vpack.c.b16 %v544, %v543
          %v560 = vpack.c.b16 %v546, %v545
          %v561 = vpack.c.b16 %v548, %v547
          %v562 = vpack.c.b16 %v550, %v549
          %v563 = vpack.c.b16 %v552, %v551
          %v564 = vpack.c.b16 %v554, %v553
          %v565 = vpack.c.b16 %v556, %v555
          %v566 = vpack.c.b16 %v558, %v557
          %575 = vmatprep.subr.bf16.mxu0 0
          %576 = vmatpush1.bf16.msra.mxu0 %v559
          %577 = vmatprep.subr.bf16.mxu0 0
          %578 = vmatpush1.bf16.msra.mxu0 %v560
          %579 = vmatprep.subr.bf16.mxu0 0
          %580 = vmatpush1.bf16.msra.mxu0 %v561
          %581 = vmatprep.subr.bf16.mxu0 0
          %582 = vmatpush1.bf16.msra.mxu0 %v562
          %583 = vmatprep.subr.bf16.mxu0 0
          %584 = vmatpush1.bf16.msra.mxu0 %v563
          %585 = vmatprep.subr.bf16.mxu0 0
          %586 = vmatpush1.bf16.msra.mxu0 %v564
          %587 = vmatprep.subr.bf16.mxu0 0
          %588 = vmatpush1.bf16.msra.mxu0 %v565
          %589 = vmatprep.subr.bf16.mxu0 0
          %590 = vmatpush1.bf16.msra.mxu0 %v566
          %591 = vmatprep.subr.bf16.mxu0 0
          %592 = vmatpush1.bf16.msra.mxu0 0
          %593 = vmatprep.subr.bf16.mxu0 0
          %594 = vmatpush1.bf16.msra.mxu0 0
          %595 = vmatprep.subr.bf16.mxu0 0
          %596 = vmatpush1.bf16.msra.mxu0 0
          %597 = vmatprep.subr.bf16.mxu0 0
          %598 = vmatpush1.bf16.msra.mxu0 0
          %599 = vmatprep.subr.bf16.mxu0 0
          %600 = vmatpush1.bf16.msra.mxu0 0
          %601 = vmatprep.subr.bf16.mxu0 0
          %602 = vmatpush1.bf16.msra.mxu0 0
          %603 = vmatprep.subr.bf16.mxu0 0
          %604 = vmatpush1.bf16.msra.mxu0 0
          %605 = vmatprep.subr.bf16.mxu0 0
          %606 = vmatpush1.bf16.msra.mxu0 0
          %607 = vmatprep.mubr.bf16.mxu0 0
          %608 = vmatmul.mubr.bf16.gmra.mrb[0].mxu0 %v503
          %v609 = vpop.f32.mrb[0].mxu0
          %v610 = vadd.f32 %v525, %v609
          %v611 = vpop.f32.mrb[0].mxu0
          %v612 = vpop.f32.mrb[0].mxu0
          %v613 = vpop.f32.mrb[0].mxu0
          %614 = vdwg.mxu0
          %v615 = vtanh.pop %v610
          %v616 = vpack.c.bf16 %v615, %v615
          %v617 = vld [vmem:[#allocation8] sm:$0xf]
          %v618 = vld [vmem:[#allocation8 + $0x4] sm:$0xf]
          %v619 = vld [vmem:[#allocation8 + $0x8] sm:$0xf]
          %v620 = vld [vmem:[#allocation8 + $0xc] sm:$0xf]
          %v621 = vld [vmem:[#allocation8 + $0x10] sm:$0xf]
          %v622 = vld [vmem:[#allocation8 + $0x14] sm:$0xf]
          %v623 = vld [vmem:[#allocation8 + $0x18] sm:$0xf]
          %v624 = vld [vmem:[#allocation8 + $0x1c] sm:$0xf]
          %v625 = vld [vmem:[#allocation8 + $0x20] sm:$0xf]
          %v626 = vld [vmem:[#allocation8 + $0x24] sm:$0xf]
          %v627 = vld [vmem:[#allocation8 + $0x28] sm:$0xf]
          %v628 = vld [vmem:[#allocation8 + $0x2c] sm:$0xf]
          %v629 = vld [vmem:[#allocation8 + $0x30] sm:$0xf]
          %v630 = vld [vmem:[#allocation8 + $0x34] sm:$0xf]
          %v631 = vld [vmem:[#allocation8 + $0x38] sm:$0xf]
          %v632 = vld [vmem:[#allocation8 + $0x3c] sm:$0xf]
          %v633 = vld [vmem:[%s5] sm:$0x1]
          %v635 = vlaneseq
          %v636 = vshrl.u32 %v635, 7
          %v637 = vsub.s32 0, %v636
          %v638 = vrot.slane %v633, %v637
          %v656 = vunpack.c.l.b16 %v617
          %v657 = vunpack.c.l.b16 %v618
          %v658 = vunpack.c.l.b16 %v619
          %v659 = vunpack.c.l.b16 %v620
          %v660 = vunpack.c.l.b16 %v621
          %v661 = vunpack.c.l.b16 %v622
          %v662 = vunpack.c.l.b16 %v623
          %v663 = vunpack.c.l.b16 %v624
          %v664 = vunpack.c.l.b16 %v625
          %v665 = vunpack.c.l.b16 %v626
          %v666 = vunpack.c.l.b16 %v627
          %v667 = vunpack.c.l.b16 %v628
          %v668 = vunpack.c.l.b16 %v629
          %v669 = vunpack.c.l.b16 %v630
          %v670 = vunpack.c.l.b16 %v631
          %v671 = vunpack.c.l.b16 %v632
          %v672 = vpack.c.b16 %v657, %v656
          %v673 = vpack.c.b16 %v659, %v658
          %v674 = vpack.c.b16 %v661, %v660
          %v675 = vpack.c.b16 %v663, %v662
          %v676 = vpack.c.b16 %v665, %v664
          %v677 = vpack.c.b16 %v667, %v666
          %v678 = vpack.c.b16 %v669, %v668
          %v679 = vpack.c.b16 %v671, %v670
          %688 = vmatprep.subr.bf16.mxu0 0
          %689 = vmatpush1.bf16.msra.mxu0 %v672
          %690 = vmatprep.subr.bf16.mxu0 0
          %691 = vmatpush1.bf16.msra.mxu0 %v673
          %692 = vmatprep.subr.bf16.mxu0 0
          %693 = vmatpush1.bf16.msra.mxu0 %v674
          %694 = vmatprep.subr.bf16.mxu0 0
          %695 = vmatpush1.bf16.msra.mxu0 %v675
          %696 = vmatprep.subr.bf16.mxu0 0
          %697 = vmatpush1.bf16.msra.mxu0 %v676
          %698 = vmatprep.subr.bf16.mxu0 0
          %699 = vmatpush1.bf16.msra.mxu0 %v677
          %700 = vmatprep.subr.bf16.mxu0 0
          %701 = vmatpush1.bf16.msra.mxu0 %v678
          %702 = vmatprep.subr.bf16.mxu0 0
          %703 = vmatpush1.bf16.msra.mxu0 %v679
          %704 = vmatprep.subr.bf16.mxu0 0
          %705 = vmatpush1.bf16.msra.mxu0 0
          %706 = vmatprep.subr.bf16.mxu0 0
          %707 = vmatpush1.bf16.msra.mxu0 0
          %708 = vmatprep.subr.bf16.mxu0 0
          %709 = vmatpush1.bf16.msra.mxu0 0
          %710 = vmatprep.subr.bf16.mxu0 0
          %711 = vmatpush1.bf16.msra.mxu0 0
          %712 = vmatprep.subr.bf16.mxu0 0
          %713 = vmatpush1.bf16.msra.mxu0 0
          %714 = vmatprep.subr.bf16.mxu0 0
          %715 = vmatpush1.bf16.msra.mxu0 0
          %716 = vmatprep.subr.bf16.mxu0 0
          %717 = vmatpush1.bf16.msra.mxu0 0
          %718 = vmatprep.subr.bf16.mxu0 0
          %719 = vmatpush1.bf16.msra.mxu0 0
          %720 = vmatprep.mubr.bf16.mxu0 0
          %721 = vmatmul.mubr.bf16.gmra.mrb[0].mxu0 %v616
          %v722 = vpop.f32.mrb[0].mxu0
          %v723 = vadd.f32 %v638, %v722
          %v724 = vpop.f32.mrb[0].mxu0
          %v725 = vpop.f32.mrb[0].mxu0
          %v726 = vpop.f32.mrb[0].mxu0
          %727 = vdwg.mxu0
          %v728 = vxor.u32 %v723, 2147483648
          %v729 = vmul.f32 %v728, 1.442695
          %v730 = vpow.pop %v729
          %v731 = vadd.f32 %v730, 1.0
          %v732 = vrcp.pop %v731
          %v733 = vmul.f32 1.0, %v732
          %734 = vst [vmem:[#allocation10] sm:$0x3] %v733
        $region98: #{tpu_custom_call.1} parent=77 // pred_fallthru
          _
        // Predicated region
        $region99: #{tpu_custom_call.1} parent=77 // pred_check
          %p735 = pneg %p192
        $region100: #{tpu_custom_call.1} parent=77 // pred_check_branch
          %737 = sbr.rel (%p735) target = $region102
        $region101: #{tpu_custom_call.1} parent=77 // pred_region
          %s739 = ssub.s32 32, 32
          %740 = vsyncadd [#allocation6], %s739
          %s741 = smul.addr %s26, 32
          %s742 = scalar_lea.hbm %s6, %s741
          %s744 = sshll.u32 [#allocation10], 4
          %s745 = int_to_ptr.vmem [resolvable:$true] %s744
          %747 = dma.vmem_to_hbm [thread:$0]  %s745, 32, %s742, [#allocation6]
        $region102: #{tpu_custom_call.1} parent=77 // pred_fallthru
          _
        // Predicated region
        $region103: #{tpu_custom_call.1} parent=77 // pred_check
          %p748 = pneg %p192
        $region104: #{tpu_custom_call.1} parent=77 // pred_check_branch
          %750 = sbr.rel (%p748) target = $region106
        $region105: #{tpu_custom_call.1} parent=77 // pred_region
          %751 = dma.done [#allocation6], 32
        $region106: #{tpu_custom_call.1} parent=77 // pred_fallthru
          _
      $region78: #{tpu_custom_call.1} parent=5 // pred_fallthru
        _
      %p752 = scmp.le.s32.totalorder 2, %s17
      // Predicated region
      $region107: #{tpu_custom_call.1} parent=5 // pred_check
        %p753 = pneg %p752
      $region108: #{tpu_custom_call.1} parent=5 // pred_check_branch
        %755 = sbr.rel (%p753) target = $region110
      $region109: #{tpu_custom_call.1} parent=5 // pred_region
        %s756 = ssub.s32 %s17, 2
      $region110: #{tpu_custom_call.1} parent=5 // pred_fallthru
        _
    $region6: #{tpu_custom_call.1} parent=1 // loop_footer
      %s21 = sadd.s32 1, %s17
    $region7: #{tpu_custom_call.1} parent=1 // loop_footer_branch
      %16 = sbr.rel target = $region3
    $region8: #{tpu_custom_call.1} parent=1 // loop_exit
      _
    %757 = vsyncpa [#allocation5], 1
    %s758 = scalar_lea.sflag [#allocation5], 1
    %759 = vsyncpa %s758, 1
    %760 = vsyncpa [#allocation9], 1
    %761 = vsyncpa [#allocation6], 1
    %s762 = scalar_lea.sflag [#allocation6], 1
    %763 = vsyncpa %s762, 1

</llo_original>
